<compile_context>
chip_gen: v7x
topology: tpu7x:2x2x1
jax: 0.10.0
libtpu: 0.0.40
codegen_flags: <defaults>
</compile_context>

<pallas_src>
import jax
import jax.numpy as jnp
from jax.experimental import pallas as pl
from jax.experimental.pallas import tpu as pltpu

EPS = 1e-5
_VMEM_BUDGET_BYTES = 48 * 1024 * 1024   # conservative: v7x physical VMEM is 64 MiB


def _generator_kernel(x_ref, w_ref, gb_ref, out_ref):
    L = w_ref.shape[0]
    B = x_ref.shape[0]
    inv_b = jnp.float32(1.0 / B)
    x = x_ref[...]                                              # (B, D) f32, carried
    for l in range(L):                                          # static unroll (L small)
        # Linear (bias omitted: cancels under training-mode BN).
        # bf16 MXU inputs, f32 accumulation.
        h = jnp.dot(x.astype(jnp.bfloat16), w_ref[l],
                    preferred_element_type=jnp.float32)         # (B, D) f32
        # BatchNorm1d, training mode: batch mean / biased variance (one pass).
        mean = jnp.sum(h, axis=0, keepdims=True) * inv_b        # (1, D)
        ex2 = jnp.sum(h * h, axis=0, keepdims=True) * inv_b     # (1, D)
        var = jnp.maximum(ex2 - mean * mean, 0.0)
        inv_std = jax.lax.rsqrt(var + EPS)                      # (1, D)
        # gamma/beta are pre-broadcast to (B, D): no sublane broadcast needed.
        r = jnp.maximum((h - mean) * (gb_ref[l, 0] * inv_std) + gb_ref[l, 1], 0.0)
        # ResidualFC for all but the last layer (statically resolved branch).
        x = x + r if l < L - 1 else r
    out_ref[...] = x


def pack_generator_params(weights, gammas, betas, batch):
    """One-time parameter packing. Call ONCE, keep the result in the param pytree.

    weights: (L, D, D) in (in, out) layout (i.e. PyTorch weight.T per layer).
    gammas/betas: (L, 1, D) or (L, D) BatchNorm1d affine params.
    batch: BN batch size B the kernel will be called with.
    Returns (w_bf16: (L, D, D) bf16, gb: (L, 2, B, D) f32).
    The Linear bias is intentionally not packed: training-mode BatchNorm
    subtracts the batch mean, so the bias cancels exactly.
    """
    L, D, _ = weights.shape
    g = jnp.broadcast_to(jnp.reshape(gammas, (L, 1, D)).astype(jnp.float32), (L, batch, D))
    b = jnp.broadcast_to(jnp.reshape(betas, (L, 1, D)).astype(jnp.float32), (L, batch, D))
    gb = jnp.stack([g, b], axis=1)                              # (L, 2, B, D)
    return weights.astype(jnp.bfloat16), gb


def generator_forward(x, w_bf16, gb):
    """Generator forward pass.

    x:      (B, D) single BN batch, or (G, B, D) = G independent BN batches
            (each grid step sees one complete batch -> BN semantics preserved).
    w_bf16: (L, D, D) bf16 weights from pack_generator_params.
    gb:     (L, 2, B, D) f32 gamma/beta from pack_generator_params.
    """
    squeeze = (x.ndim == 2)
    x3 = x[None] if squeeze else x
    G, B, D = x3.shape
    L = w_bf16.shape[0]
    assert w_bf16.shape == (L, D, D) and w_bf16.dtype == jnp.bfloat16
    assert gb.shape == (L, 2, B, D), "gb was packed for a different batch size"

    # Fully-VMEM-resident layout, gated against the smallest generation budget.
    # TODO(synk): streamed fallback for large D/L = grid over L ("arbitrary"),
    # weight BlockSpec ((1, D, D), lambda l: (l, 0, 0), pipeline_mode=pl.Buffered(2)),
    # activations carried in a VMEM scratch accumulator.
    resident = 2 * (w_bf16.size * 2 + gb.size * 4 + 2 * B * D * 4)   # double-buffered
    assert resident + (4 << 20) <= _VMEM_BUDGET_BYTES, (
        "Generator too large for the fully-resident VMEM layout; "
        "switch to the per-layer streamed grid.")

    out = pl.pallas_call(
        _generator_kernel,
        out_shape=jax.ShapeDtypeStruct((G, B, D), jnp.float32),
        grid=(G,),
        in_specs=[
            pl.BlockSpec((None, B, D), lambda g: (g, 0, 0)),       # one full BN batch / step
            pl.BlockSpec((L, D, D), lambda g: (0, 0, 0)),          # weights: resident
            pl.BlockSpec((L, 2, B, D), lambda g: (0, 0, 0, 0)),    # gamma/beta: resident
        ],
        out_specs=pl.BlockSpec((None, B, D), lambda g: (g, 0, 0)),
        compiler_params=pltpu.CompilerParams(
            dimension_semantics=("parallel",),        # v7x: groups split across 2 TCs
            vmem_limit_bytes=_VMEM_BUDGET_BYTES,      # explicit: above v5e's 16 MiB default
        ),
    )(x3.astype(jnp.float32), w_bf16, gb)
    return out[0] if squeeze else out


def generator_reference(x, weights, biases, gammas, betas, matmul_dtype=None):
    """Pure-JAX reference mirroring PyTorch Generator.forward (training-mode BN).

    matmul_dtype=None  -> exact f32 module semantics (including Linear bias).
    matmul_dtype=bf16  -> mirrors the kernel's MXU input precision (tight check).
    """
    L = weights.shape[0]
    for l in range(L):
        a, w = x, weights[l]
        if matmul_dtype is not None:
            a, w = a.astype(matmul_dtype), w.astype(matmul_dtype)
        h = jnp.dot(a, w, preferred_element_type=jnp.float32) + biases[l]
        mean = jnp.mean(h, axis=0, keepdims=True)
        var = jnp.mean((h - mean) ** 2, axis=0, keepdims=True)
        h = (h - mean) / jnp.sqrt(var + EPS) * gammas[l] + betas[l]
        r = jnp.maximum(h, 0.0)
        x = x + r if l < L - 1 else r
    return x


if __name__ == "__main__":
    # Generator(random_dim=D, hidden_dim=(D, D, D)) -> 2 ResidualFC + 1 final block.
    B = 8      # BN batch size
    D = 128    # random_dim == every hidden_dim entry (module asserts this)
    L = 3      # len(hidden_dim)
    G = 2      # independent noise batches (demonstrates the parallel grid axis)

    key = jax.random.PRNGKey(0)
    kx, kw, kb, kg, kbt = jax.random.split(key, 5)

    x = jax.random.normal(kx, (G, B, D), dtype=jnp.float32)

    # PyTorch Linear stores weight as (out, in) and computes x @ W^T;
    # pre-transpose to (in, out) as one-time wrapper-side glue.
    w_pt = jax.random.normal(kw, (L, D, D), dtype=jnp.float32) * 0.05     # (L, out, in)
    weights = jnp.transpose(w_pt, (0, 2, 1))                              # (L, in, out)
    biases = jax.random.normal(kb, (L, 1, D), dtype=jnp.float32) * 0.05   # cancels under BN
    gammas = 1.0 + 0.1 * jax.random.normal(kg, (L, 1, D), dtype=jnp.float32)
    betas = 0.1 * jax.random.normal(kbt, (L, 1, D), dtype=jnp.float32)

    # Pack ONCE (bf16 cast + affine broadcast hoisted out of the hot path).
    w_bf16, gb = pack_generator_params(weights, gammas, betas, batch=B)
    fwd = jax.jit(generator_forward)

    out = jax.block_until_ready(fwd(x, w_bf16, gb))
    assert out.shape == (G, B, D)

    for g in range(G):
        # (a) Kernel-logic check: reference with the same bf16 MXU inputs (tight).
        ref_bf16 = generator_reference(x[g], weights, biases, gammas, betas,
                                       matmul_dtype=jnp.bfloat16)
        assert jnp.allclose(out[g], ref_bf16, atol=1e-3, rtol=1e-3), \
            "mismatch vs bf16-matched ref"
        # (b) Module-semantics check: exact f32 PyTorch forward, within bf16 precision.
        ref_f32 = generator_reference(x[g], weights, biases, gammas, betas)
        assert jnp.allclose(out[g], ref_f32, atol=5e-2, rtol=5e-2), \
            "mismatch vs f32 module ref"

    # Single-BN-batch (2-D input) path.
    out2 = jax.block_until_ready(fwd(x[0], w_bf16, gb))
    assert out2.shape == (B, D)
    ref2 = generator_reference(x[0], weights, biases, gammas, betas,
                               matmul_dtype=jnp.bfloat16)
    assert jnp.allclose(out2, ref2, atol=1e-3, rtol=1e-3), "mismatch on 2-D path"

    print("KERNEL_OK")
</pallas_src>

<mosaic_0001>
module attributes {stable_mosaic.version = 11 : i64} {
  func.func @_generator_kernel(%arg0: i32, %arg1: memref<1x8x128xf32, #tpu.memory_space<vmem>>, %arg2: memref<3x128x128xbf16, #tpu.memory_space<vmem>>, %arg3: memref<3x2x8x128xf32, #tpu.memory_space<vmem>>, %arg4: memref<1x8x128xf32, #tpu.memory_space<vmem>>) attributes {dimension_semantics = [#tpu.dimension_semantics<parallel>], iteration_bounds = array<i64: 2>, scalar_prefetch = 0 : i64, scratch_operands = 0 : i64, tpu.core_type = #tpu.core_type<tc>, window_params = [{transform_indices = @transform_0, window_bounds = array<i64: 1, 8, 128>}, {pipeline_mode = #tpu.pipeline_mode<synchronous>, transform_indices = @transform_1, window_bounds = array<i64: 3, 128, 128>}, {pipeline_mode = #tpu.pipeline_mode<synchronous>, transform_indices = @transform_2, window_bounds = array<i64: 3, 2, 8, 128>}, {transform_indices = @transform_3, window_bounds = array<i64: 1, 8, 128>}]} {
    %c0 = arith.constant 0 : index
    %c0_0 = arith.constant 0 : index
    %c0_1 = arith.constant 0 : index
    %0 = vector.load %arg1[%c0, %c0_0, %c0_1] : memref<1x8x128xf32, #tpu.memory_space<vmem>>, vector<1x8x128xf32>
    %1 = vector.shape_cast %0 : vector<1x8x128xf32> to vector<8x128xf32>
    %2 = arith.truncf %1 : vector<8x128xf32> to vector<8x128xbf16>
    %c0_2 = arith.constant 0 : index
    %c0_3 = arith.constant 0 : index
    %c0_4 = arith.constant 0 : index
    %3 = vector.load %arg2[%c0_2, %c0_3, %c0_4] : memref<3x128x128xbf16, #tpu.memory_space<vmem>>, vector<1x128x128xbf16>
    %4 = vector.shape_cast %3 : vector<1x128x128xbf16> to vector<128x128xbf16>
    %cst = arith.constant dense<0.000000e+00> : vector<8x128xf32>
    %5 = tpu.matmul %2, %4, %cst {dimension_numbers = #tpu.dot_dimension_numbers<[1], [0], [0], [1], [0, 0, 1, 1], [], []>} : vector<8x128xbf16>, vector<128x128xbf16>, vector<8x128xf32> -> vector<8x128xf32>
    %cst_5 = arith.constant dense<0.000000e+00> : vector<128xf32>
    %6 = vector.multi_reduction <add>, %5, %cst_5 [0] : vector<8x128xf32> to vector<128xf32>
    %7 = vector.shape_cast %6 : vector<128xf32> to vector<1x128xf32>
    %cst_6 = arith.constant 1.250000e-01 : f32
    %8 = vector.broadcast %cst_6 : f32 to vector<1x128xf32>
    %9 = arith.mulf %7, %8 : vector<1x128xf32>
    %10 = arith.mulf %5, %5 : vector<8x128xf32>
    %cst_7 = arith.constant dense<0.000000e+00> : vector<128xf32>
    %11 = vector.multi_reduction <add>, %10, %cst_7 [0] : vector<8x128xf32> to vector<128xf32>
    %12 = vector.shape_cast %11 : vector<128xf32> to vector<1x128xf32>
    %cst_8 = arith.constant 1.250000e-01 : f32
    %13 = vector.broadcast %cst_8 : f32 to vector<1x128xf32>
    %14 = arith.mulf %12, %13 : vector<1x128xf32>
    %15 = arith.mulf %9, %9 : vector<1x128xf32>
    %16 = arith.subf %14, %15 : vector<1x128xf32>
    %cst_9 = arith.constant 0.000000e+00 : f32
    %17 = vector.broadcast %cst_9 : f32 to vector<1x128xf32>
    %18 = arith.maximumf %16, %17 : vector<1x128xf32>
    %cst_10 = arith.constant 9.99999974E-6 : f32
    %19 = vector.broadcast %cst_10 : f32 to vector<1x128xf32>
    %20 = arith.addf %18, %19 : vector<1x128xf32>
    %21 = math.rsqrt %20 : vector<1x128xf32>
    %22 = vector.broadcast %9 : vector<1x128xf32> to vector<8x128xf32>
    %23 = arith.subf %5, %22 : vector<8x128xf32>
    %c0_11 = arith.constant 0 : index
    %c0_12 = arith.constant 0 : index
    %c0_13 = arith.constant 0 : index
    %c0_14 = arith.constant 0 : index
    %24 = vector.load %arg3[%c0_11, %c0_12, %c0_13, %c0_14] : memref<3x2x8x128xf32, #tpu.memory_space<vmem>>, vector<1x1x8x128xf32>
    %25 = vector.shape_cast %24 : vector<1x1x8x128xf32> to vector<8x128xf32>
    %26 = vector.broadcast %21 : vector<1x128xf32> to vector<8x128xf32>
    %27 = arith.mulf %25, %26 : vector<8x128xf32>
    %28 = arith.mulf %23, %27 : vector<8x128xf32>
    %c0_15 = arith.constant 0 : index
    %c1 = arith.constant 1 : index
    %c0_16 = arith.constant 0 : index
    %c0_17 = arith.constant 0 : index
    %29 = vector.load %arg3[%c0_15, %c1, %c0_16, %c0_17] : memref<3x2x8x128xf32, #tpu.memory_space<vmem>>, vector<1x1x8x128xf32>
    %30 = vector.shape_cast %29 : vector<1x1x8x128xf32> to vector<8x128xf32>
    %31 = arith.addf %28, %30 : vector<8x128xf32>
    %cst_18 = arith.constant 0.000000e+00 : f32
    %32 = vector.broadcast %cst_18 : f32 to vector<8x128xf32>
    %33 = arith.maximumf %31, %32 : vector<8x128xf32>
    %34 = arith.addf %1, %33 : vector<8x128xf32>
    %35 = arith.truncf %34 : vector<8x128xf32> to vector<8x128xbf16>
    %c1_19 = arith.constant 1 : index
    %c0_20 = arith.constant 0 : index
    %c0_21 = arith.constant 0 : index
    %36 = vector.load %arg2[%c1_19, %c0_20, %c0_21] : memref<3x128x128xbf16, #tpu.memory_space<vmem>>, vector<1x128x128xbf16>
    %37 = vector.shape_cast %36 : vector<1x128x128xbf16> to vector<128x128xbf16>
    %cst_22 = arith.constant dense<0.000000e+00> : vector<8x128xf32>
    %38 = tpu.matmul %35, %37, %cst_22 {dimension_numbers = #tpu.dot_dimension_numbers<[1], [0], [0], [1], [0, 0, 1, 1], [], []>} : vector<8x128xbf16>, vector<128x128xbf16>, vector<8x128xf32> -> vector<8x128xf32>
    %cst_23 = arith.constant dense<0.000000e+00> : vector<128xf32>
    %39 = vector.multi_reduction <add>, %38, %cst_23 [0] : vector<8x128xf32> to vector<128xf32>
    %40 = vector.shape_cast %39 : vector<128xf32> to vector<1x128xf32>
    %cst_24 = arith.constant 1.250000e-01 : f32
    %41 = vector.broadcast %cst_24 : f32 to vector<1x128xf32>
    %42 = arith.mulf %40, %41 : vector<1x128xf32>
    %43 = arith.mulf %38, %38 : vector<8x128xf32>
    %cst_25 = arith.constant dense<0.000000e+00> : vector<128xf32>
    %44 = vector.multi_reduction <add>, %43, %cst_25 [0] : vector<8x128xf32> to vector<128xf32>
    %45 = vector.shape_cast %44 : vector<128xf32> to vector<1x128xf32>
    %cst_26 = arith.constant 1.250000e-01 : f32
    %46 = vector.broadcast %cst_26 : f32 to vector<1x128xf32>
    %47 = arith.mulf %45, %46 : vector<1x128xf32>
    %48 = arith.mulf %42, %42 : vector<1x128xf32>
    %49 = arith.subf %47, %48 : vector<1x128xf32>
    %cst_27 = arith.constant 0.000000e+00 : f32
    %50 = vector.broadcast %cst_27 : f32 to vector<1x128xf32>
    %51 = arith.maximumf %49, %50 : vector<1x128xf32>
    %cst_28 = arith.constant 9.99999974E-6 : f32
    %52 = vector.broadcast %cst_28 : f32 to vector<1x128xf32>
    %53 = arith.addf %51, %52 : vector<1x128xf32>
    %54 = math.rsqrt %53 : vector<1x128xf32>
    %55 = vector.broadcast %42 : vector<1x128xf32> to vector<8x128xf32>
    %56 = arith.subf %38, %55 : vector<8x128xf32>
    %c1_29 = arith.constant 1 : index
    %c0_30 = arith.constant 0 : index
    %c0_31 = arith.constant 0 : index
    %c0_32 = arith.constant 0 : index
    %57 = vector.load %arg3[%c1_29, %c0_30, %c0_31, %c0_32] : memref<3x2x8x128xf32, #tpu.memory_space<vmem>>, vector<1x1x8x128xf32>
    %58 = vector.shape_cast %57 : vector<1x1x8x128xf32> to vector<8x128xf32>
    %59 = vector.broadcast %54 : vector<1x128xf32> to vector<8x128xf32>
    %60 = arith.mulf %58, %59 : vector<8x128xf32>
    %61 = arith.mulf %56, %60 : vector<8x128xf32>
    %c1_33 = arith.constant 1 : index
    %c1_34 = arith.constant 1 : index
    %c0_35 = arith.constant 0 : index
    %c0_36 = arith.constant 0 : index
    %62 = vector.load %arg3[%c1_33, %c1_34, %c0_35, %c0_36] : memref<3x2x8x128xf32, #tpu.memory_space<vmem>>, vector<1x1x8x128xf32>
    %63 = vector.shape_cast %62 : vector<1x1x8x128xf32> to vector<8x128xf32>
    %64 = arith.addf %61, %63 : vector<8x128xf32>
    %cst_37 = arith.constant 0.000000e+00 : f32
    %65 = vector.broadcast %cst_37 : f32 to vector<8x128xf32>
    %66 = arith.maximumf %64, %65 : vector<8x128xf32>
    %67 = arith.addf %34, %66 : vector<8x128xf32>
    %68 = arith.truncf %67 : vector<8x128xf32> to vector<8x128xbf16>
    %c2 = arith.constant 2 : index
    %c0_38 = arith.constant 0 : index
    %c0_39 = arith.constant 0 : index
    %69 = vector.load %arg2[%c2, %c0_38, %c0_39] : memref<3x128x128xbf16, #tpu.memory_space<vmem>>, vector<1x128x128xbf16>
    %70 = vector.shape_cast %69 : vector<1x128x128xbf16> to vector<128x128xbf16>
    %cst_40 = arith.constant dense<0.000000e+00> : vector<8x128xf32>
    %71 = tpu.matmul %68, %70, %cst_40 {dimension_numbers = #tpu.dot_dimension_numbers<[1], [0], [0], [1], [0, 0, 1, 1], [], []>} : vector<8x128xbf16>, vector<128x128xbf16>, vector<8x128xf32> -> vector<8x128xf32>
    %cst_41 = arith.constant dense<0.000000e+00> : vector<128xf32>
    %72 = vector.multi_reduction <add>, %71, %cst_41 [0] : vector<8x128xf32> to vector<128xf32>
    %73 = vector.shape_cast %72 : vector<128xf32> to vector<1x128xf32>
    %cst_42 = arith.constant 1.250000e-01 : f32
    %74 = vector.broadcast %cst_42 : f32 to vector<1x128xf32>
    %75 = arith.mulf %73, %74 : vector<1x128xf32>
    %76 = arith.mulf %71, %71 : vector<8x128xf32>
    %cst_43 = arith.constant dense<0.000000e+00> : vector<128xf32>
    %77 = vector.multi_reduction <add>, %76, %cst_43 [0] : vector<8x128xf32> to vector<128xf32>
    %78 = vector.shape_cast %77 : vector<128xf32> to vector<1x128xf32>
    %cst_44 = arith.constant 1.250000e-01 : f32
    %79 = vector.broadcast %cst_44 : f32 to vector<1x128xf32>
    %80 = arith.mulf %78, %79 : vector<1x128xf32>
    %81 = arith.mulf %75, %75 : vector<1x128xf32>
    %82 = arith.subf %80, %81 : vector<1x128xf32>
    %cst_45 = arith.constant 0.000000e+00 : f32
    %83 = vector.broadcast %cst_45 : f32 to vector<1x128xf32>
    %84 = arith.maximumf %82, %83 : vector<1x128xf32>
    %cst_46 = arith.constant 9.99999974E-6 : f32
    %85 = vector.broadcast %cst_46 : f32 to vector<1x128xf32>
    %86 = arith.addf %84, %85 : vector<1x128xf32>
    %87 = math.rsqrt %86 : vector<1x128xf32>
    %88 = vector.broadcast %75 : vector<1x128xf32> to vector<8x128xf32>
    %89 = arith.subf %71, %88 : vector<8x128xf32>
    %c2_47 = arith.constant 2 : index
    %c0_48 = arith.constant 0 : index
    %c0_49 = arith.constant 0 : index
    %c0_50 = arith.constant 0 : index
    %90 = vector.load %arg3[%c2_47, %c0_48, %c0_49, %c0_50] : memref<3x2x8x128xf32, #tpu.memory_space<vmem>>, vector<1x1x8x128xf32>
    %91 = vector.shape_cast %90 : vector<1x1x8x128xf32> to vector<8x128xf32>
    %92 = vector.broadcast %87 : vector<1x128xf32> to vector<8x128xf32>
    %93 = arith.mulf %91, %92 : vector<8x128xf32>
    %94 = arith.mulf %89, %93 : vector<8x128xf32>
    %c2_51 = arith.constant 2 : index
    %c1_52 = arith.constant 1 : index
    %c0_53 = arith.constant 0 : index
    %c0_54 = arith.constant 0 : index
    %95 = vector.load %arg3[%c2_51, %c1_52, %c0_53, %c0_54] : memref<3x2x8x128xf32, #tpu.memory_space<vmem>>, vector<1x1x8x128xf32>
    %96 = vector.shape_cast %95 : vector<1x1x8x128xf32> to vector<8x128xf32>
    %97 = arith.addf %94, %96 : vector<8x128xf32>
    %cst_55 = arith.constant 0.000000e+00 : f32
    %98 = vector.broadcast %cst_55 : f32 to vector<8x128xf32>
    %99 = arith.maximumf %97, %98 : vector<8x128xf32>
    %c0_56 = arith.constant 0 : index
    %c0_57 = arith.constant 0 : index
    %c0_58 = arith.constant 0 : index
    %100 = vector.load %arg4[%c0_56, %c0_57, %c0_58] : memref<1x8x128xf32, #tpu.memory_space<vmem>>, vector<1x8x128xf32>
    %101 = vector.shape_cast %100 : vector<1x8x128xf32> to vector<8x128xf32>
    %102 = vector.shape_cast %99 : vector<8x128xf32> to vector<1x8x128xf32>
    tpu.vector_store %arg4[%c0_56, %c0_57, %c0_58], %102 {strides = array<i32>} : memref<1x8x128xf32, #tpu.memory_space<vmem>>, vector<1x8x128xf32>,
    return
  }
  func.func @transform_0(%arg0: i32) -> (i32, i32, i32) {
    %c0_i32 = arith.constant 0 : i32
    %c0_i32_0 = arith.constant 0 : i32
    %c0_i32_1 = arith.constant 0 : i32
    return %arg0, %c0_i32, %c0_i32_0 : i32, i32, i32
  }
  func.func @transform_1(%arg0: i32) -> (i32, i32, i32) {
    %c0_i32 = arith.constant 0 : i32
    %c0_i32_0 = arith.constant 0 : i32
    %c0_i32_1 = arith.constant 0 : i32
    %c0_i32_2 = arith.constant 0 : i32
    return %c0_i32, %c0_i32_0, %c0_i32_1 : i32, i32, i32
  }
  func.func @transform_2(%arg0: i32) -> (i32, i32, i32, i32) {
    %c0_i32 = arith.constant 0 : i32
    %c0_i32_0 = arith.constant 0 : i32
    %c0_i32_1 = arith.constant 0 : i32
    %c0_i32_2 = arith.constant 0 : i32
    %c0_i32_3 = arith.constant 0 : i32
    return %c0_i32, %c0_i32_0, %c0_i32_1, %c0_i32_2 : i32, i32, i32, i32
  }
  func.func @transform_3(%arg0: i32) -> (i32, i32, i32) {
    %c0_i32 = arith.constant 0 : i32
    %c0_i32_0 = arith.constant 0 : i32
    %c0_i32_1 = arith.constant 0 : i32
    return %arg0, %c0_i32, %c0_i32_0 : i32, i32, i32
  }
}

</mosaic_0001>

<llo_original>
// kernel: generator_forward.1
$region0: #{generator_forward.1}
  #allocation0 [shape = 'u32[]', space=smem, size = 0x4, offset = 0x4, fixed_abs, tag = 'smem constant byte address 0x4 - core index']
  #allocation1 [shape = 'u32[144,128]{1,0:T(1,128)}', space=vmem, size = 0x12000, scoped, tag = 'internal scratch']
  %s0 = inlined_call_operand.hbm [shape: f32[2,8,128], index: 0, kind: input, shape index: {}]
  %s1 = inlined_call_operand.hbm [shape: bf16[3,128,128], index: 1, kind: input, shape index: {}]
  %s2 = inlined_call_operand.hbm [shape: f32[3,2,8,128], index: 2, kind: input, shape index: {}]
  %s3 = inlined_call_operand.hbm [shape: f32[2,8,128], index: 3, kind: output, shape index: {}]
  %s4 = sld [smem:[#allocation0]]
  $region57: #{generator_forward.1} parent=0
    _
  %s6 = ssub.s32 1, %s4
  %s7 = scalar_select 0, %s6, %s4
  $region1: #{generator_forward.1} parent=0
    #allocation2 [shape = 'u8[8192]{0}', space=vmem, size = 0x2000, scoped, tag = 'input window, operand 0']
    #allocation3 [shape = 's32[2]{0}', space=sflag, size = 0x8, scoped, tag = 'scoped memory for generator_forward.1']
    #allocation4 [shape = 's32[2]{0}', space=sflag, size = 0x8, scoped, tag = 'scoped memory for generator_forward.1']
    #allocation5 [shape = 'u8[98304]{0}', space=vmem, size = 0x18000, scoped, tag = 'input window, operand 1, single buffered']
    #allocation6 [shape = 's32[1]{0}', space=sflag, size = 0x4, scoped, tag = 'scoped memory for generator_forward.1']
    #allocation7 [shape = 'u8[24576]{0}', space=vmem, size = 0x6000, scoped, tag = 'input window, operand 2, single buffered']
    #allocation8 [shape = 'u8[8192]{0}', space=vmem, size = 0x2000, scoped, tag = 'output window, operand 0']
    %8 = vsyncpa [#allocation3], 0
    %s9 = scalar_lea.sflag [#allocation3], 1
    %10 = vsyncpa %s9, 0
    %11 = vsyncpa [#allocation6], 0
    %12 = vsyncpa [#allocation4], 0
    %s13 = scalar_lea.sflag [#allocation4], 1
    %14 = vsyncpa %s13, 0
    loop: start=0, step=1, limit=4
    $region2: #{generator_forward.1} parent=1 // loop_pre_header
      _
    $region3: #{generator_forward.1} parent=1 // loop_header
      %s16 = sphi 0, %s20
      %p17 = scmp.ge.s32.totalorder %s16, 4
      %s26 = sphi 0, %s28
      %s29 = sphi 0, %s26
      %s30 = sphi 0, %s29
      %s46 = sphi 0, %s30
      %s50 = sphi 0, %s50
      %s52 = sphi 0, %s50
      %s53 = sphi 0, %s52
      %s67 = sphi 0, %s53
      %s71 = sphi 0, %s71
      %s73 = sphi 0, %s71
      %s74 = sphi 0, %s73
      %s88 = sphi 0, %s74
      %s94 = sphi 0, %s96
      %s97 = sphi 0, %s94
      %s98 = sphi 0, %s97
      %s114 = sphi 0, %s98
    $region4: #{generator_forward.1} parent=1 // loop_header_branch
      %19 = sbr.rel (%p17) target = $region8
    $region5: #{generator_forward.1} parent=1 // loop_body
      %s21 = ssub.s32 %s16, 1
      %s22 = ssub.s32 %s16, 2
      %s23 = sadd.s32 %s16, 1
      %s24 = ssub.s32 %s16, %s23
      %p25 = scmp.eq.s32.totalorder %s24, 0
      %s27 = sadd.s32 %s26, 1
      %s28 = scalar_select %p25, %s26, %s27
      %p31 = pneg %p25
      %p32 = scmp.eq.s32.totalorder %s16, 1
      %p33 = por %p31, %p32
      %p34 = scmp.ne.s32.totalorder %s26, %s29
      %p35 = scmp.eq.s32.totalorder %s16, 0
      %p36 = por %p34, %p35
      %p37 = scmp.ne.s32.totalorder %s26, %s29
      %p38 = scmp.eq.s32.totalorder %s21, 1
      %p39 = por %p37, %p38
      %p40 = scmp.ne.s32.totalorder %s29, %s30
      %p41 = scmp.eq.s32.totalorder %s21, 0
      %p42 = por %p40, %p41
      %p43 = scmp.ne.s32.totalorder %s29, %s30
      %p44 = scmp.eq.s32.totalorder %s22, 1
      %p45 = por %p43, %p44
      %p47 = scmp.ne.s32.totalorder %s30, %s46
      %p48 = scmp.eq.s32.totalorder %s22, 0
      %p49 = por %p47, %p48
      %s51 = sadd.s32 %s50, 1
      %p54 = scmp.eq.s32.totalorder %s16, 1
      %p55 = scmp.ne.s32.totalorder %s50, %s52
      %p56 = scmp.eq.s32.totalorder %s16, 0
      %p57 = por %p55, %p56
      %p58 = scmp.ne.s32.totalorder %s50, %s52
      %p59 = scmp.eq.s32.totalorder %s21, 1
      %p60 = por %p58, %p59
      %p61 = scmp.ne.s32.totalorder %s52, %s53
      %p62 = scmp.eq.s32.totalorder %s21, 0
      %p63 = por %p61, %p62
      %p64 = scmp.ne.s32.totalorder %s52, %s53
      %p65 = scmp.eq.s32.totalorder %s22, 1
      %p66 = por %p64, %p65
      %p68 = scmp.ne.s32.totalorder %s53, %s67
      %p69 = scmp.eq.s32.totalorder %s22, 0
      %p70 = por %p68, %p69
      %s72 = sadd.s32 %s71, 1
      %p75 = scmp.eq.s32.totalorder %s16, 1
      %p76 = scmp.ne.s32.totalorder %s71, %s73
      %p77 = scmp.eq.s32.totalorder %s16, 0
      %p78 = por %p76, %p77
      %p79 = scmp.ne.s32.totalorder %s71, %s73
      %p80 = scmp.eq.s32.totalorder %s21, 1
      %p81 = por %p79, %p80
      %p82 = scmp.ne.s32.totalorder %s73, %s74
      %p83 = scmp.eq.s32.totalorder %s21, 0
      %p84 = por %p82, %p83
      %p85 = scmp.ne.s32.totalorder %s73, %s74
      %p86 = scmp.eq.s32.totalorder %s22, 1
      %p87 = por %p85, %p86
      %p89 = scmp.ne.s32.totalorder %s74, %s88
      %p90 = scmp.eq.s32.totalorder %s22, 0
      %p91 = por %p89, %p90
      %s92 = ssub.s32 %s16, %s23
      %p93 = scmp.eq.s32.totalorder %s92, 0
      %s95 = sadd.s32 %s94, 1
      %s96 = scalar_select %p93, %s94, %s95
      %p99 = pneg %p93
      %p100 = scmp.eq.s32.totalorder %s16, 1
      %p101 = por %p99, %p100
      %p102 = scmp.ne.s32.totalorder %s94, %s97
      %p103 = scmp.eq.s32.totalorder %s16, 0
      %p104 = por %p102, %p103
      %p105 = scmp.ne.s32.totalorder %s94, %s97
      %p106 = scmp.eq.s32.totalorder %s21, 1
      %p107 = por %p105, %p106
      %p108 = scmp.ne.s32.totalorder %s97, %s98
      %p109 = scmp.eq.s32.totalorder %s21, 0
      %p110 = por %p108, %p109
      %p111 = scmp.ne.s32.totalorder %s97, %s98
      %p112 = scmp.eq.s32.totalorder %s22, 1
      %p113 = por %p111, %p112
      %p115 = scmp.ne.s32.totalorder %s98, %s114
      %p116 = scmp.eq.s32.totalorder %s22, 0
      %p117 = por %p115, %p116
      %p118 = scmp.le.s32.totalorder 1, %s16
      %p119 = scmp.lt.s32.totalorder %s16, 3
      %p120 = pnand %p118, %p119
      %p121 = pneg %p120
      // Predicated region
      $region9: #{generator_forward.1} parent=5 // pred_check
        _
      $region10: #{generator_forward.1} parent=5 // pred_check_branch
        %123 = sbr.rel (%p120) target = $region12
      $region11: #{generator_forward.1} parent=5 // pred_region
        %s124 = ssub.s32 %s16, 1
        // Predicated region
        $region13: #{generator_forward.1} parent=11 // pred_check
          %p125 = pneg %p63
        $region14: #{generator_forward.1} parent=11 // pred_check_branch
          %127 = sbr.rel (%p125) target = $region16
        $region15: #{generator_forward.1} parent=11 // pred_region
          %s129 = ssub.s32 3072, 3072
          %130 = vsyncadd [#allocation6], %s129
          %s131 = sshll.u32 [#allocation5], 4
          %s132 = int_to_ptr.vmem [resolvable:$true] %s131
          %137 = dma.hbm_to_vmem [thread:$0]  %s1, 3072, %s132, [#allocation6], 64, 64, 4
        $region16: #{generator_forward.1} parent=11 // pred_fallthru
          _
        // Predicated region
        $region17: #{generator_forward.1} parent=11 // pred_check
          %p138 = pneg %p84
        $region18: #{generator_forward.1} parent=11 // pred_check_branch
          %140 = sbr.rel (%p138) target = $region20
        $region19: #{generator_forward.1} parent=11 // pred_region
          %s142 = ssub.s32 768, 768
          %143 = vsyncadd [#allocation6], %s142
          %s144 = sshll.u32 [#allocation7], 4
          %s145 = int_to_ptr.vmem [resolvable:$true] %s144
          %150 = dma.hbm_to_vmem [thread:$0]  %s2, 768, %s145, [#allocation6], 128, 128, 8
        $region20: #{generator_forward.1} parent=11 // pred_fallthru
          _
      $region12: #{generator_forward.1} parent=5 // pred_fallthru
        _
      %p151 = scmp.lt.s32.totalorder %s16, 2
      // Predicated region
      $region21: #{generator_forward.1} parent=5 // pred_check
        %p152 = pneg %p151
      $region22: #{generator_forward.1} parent=5 // pred_check_branch
        %154 = sbr.rel (%p152) target = $region24
      $region23: #{generator_forward.1} parent=5 // pred_region
        // Predicated region
        $region25: #{generator_forward.1} parent=23 // pred_check
          %p155 = pneg %p36
        $region26: #{generator_forward.1} parent=23 // pred_check_branch
          %157 = sbr.rel (%p155) target = $region28
        $region27: #{generator_forward.1} parent=23 // pred_region
          %s158 = sand.u32 %s26, 1
          %s159 = scalar_lea.sflag [#allocation3], %s158
          %s160 = sand.u32 %s26, 1
          %s161 = smul.addr %s160, 8
          %s162 = scalar_lea.vmem [#allocation2], %s161
          %s164 = ssub.s32 128, 128
          %165 = vsyncadd %s159, %s164
          %s166 = smul.addr %s16, 128
          %s167 = scalar_lea.hbm %s0, %s166
          %s169 = sshll.u32 %s162, 4
          %s170 = int_to_ptr.vmem [resolvable:$true] %s169
          %172 = dma.hbm_to_vmem [thread:$0]  %s167, 128, %s170, %s159
        $region28: #{generator_forward.1} parent=23 // pred_fallthru
          _
      $region24: #{generator_forward.1} parent=5 // pred_fallthru
        _
      %p173 = scmp.le.s32.totalorder 1, %s16
      %p174 = scmp.lt.s32.totalorder %s16, 3
      %p175 = pnand %p173, %p174
      %p176 = pneg %p175
      // Predicated region
      $region29: #{generator_forward.1} parent=5 // pred_check
        _
      $region30: #{generator_forward.1} parent=5 // pred_check_branch
        %178 = sbr.rel (%p175) target = $region32
      $region31: #{generator_forward.1} parent=5 // pred_region
        %s179 = ssub.s32 %s16, 1
        %s180 = sand.u32 %s29, 1
        %s181 = scalar_lea.sflag [#allocation3], %s180
        %s182 = sand.u32 %s29, 1
        %s183 = smul.addr %s182, 8
        %s184 = scalar_lea.vmem [#allocation2], %s183
        // Predicated region
        $region33: #{generator_forward.1} parent=31 // pred_check
          %p185 = pneg %p42
        $region34: #{generator_forward.1} parent=31 // pred_check_branch
          %187 = sbr.rel (%p185) target = $region36
        $region35: #{generator_forward.1} parent=31 // pred_region
          %188 = dma.done %s181, 128
        $region36: #{generator_forward.1} parent=31 // pred_fallthru
          _
        // Predicated region
        $region37: #{generator_forward.1} parent=31 // pred_check
          %p189 = pneg %p63
        $region38: #{generator_forward.1} parent=31 // pred_check_branch
          %191 = sbr.rel (%p189) target = $region40
        $region39: #{generator_forward.1} parent=31 // pred_region
          %192 = dma.done [#allocation6], 3072
        $region40: #{generator_forward.1} parent=31 // pred_fallthru
          _
        // Predicated region
        $region41: #{generator_forward.1} parent=31 // pred_check
          %p193 = pneg %p84
        $region42: #{generator_forward.1} parent=31 // pred_check_branch
          %195 = sbr.rel (%p193) target = $region44
        $region43: #{generator_forward.1} parent=31 // pred_region
          %196 = dma.done [#allocation6], 768
        $region44: #{generator_forward.1} parent=31 // pred_fallthru
          _
        %s197 = sand.u32 %s29, 1
        %s198 = scalar_lea.sflag [#allocation3], %s197
        %s199 = sand.u32 %s29, 1
        %s200 = smul.addr %s199, 8
        %s201 = scalar_lea.vmem [#allocation2], %s200
        %p202 = pneg %p42
        %p203 = pneg %p39
        %p204 = pneg %p63
        %p205 = pneg %p60
        %p206 = pneg %p84
        %p207 = pneg %p81
        %p208 = pneg %p110
        %p209 = pneg %p107
        %s210 = sand.u32 %s97, 1
        %s211 = scalar_lea.sflag [#allocation4], %s210
        %s212 = sand.u32 %s97, 1
        %s213 = smul.addr %s212, 8
        %s214 = scalar_lea.vmem [#allocation8], %s213
        %v216 = vld [vmem:[%s184] sm:$0xff]
        %v217 = vpack.c.bf16 %v216, %v216
        %v218 = vld [vmem:[#allocation5] sm:$0xf]
        %v219 = vld [vmem:[#allocation5 + $0x4] sm:$0xf]
        %v220 = vld [vmem:[#allocation5 + $0x8] sm:$0xf]
        %v221 = vld [vmem:[#allocation5 + $0xc] sm:$0xf]
        %v222 = vld [vmem:[#allocation5 + $0x10] sm:$0xf]
        %v223 = vld [vmem:[#allocation5 + $0x14] sm:$0xf]
        %v224 = vld [vmem:[#allocation5 + $0x18] sm:$0xf]
        %v225 = vld [vmem:[#allocation5 + $0x1c] sm:$0xf]
        %v226 = vld [vmem:[#allocation5 + $0x20] sm:$0xf]
        %v227 = vld [vmem:[#allocation5 + $0x24] sm:$0xf]
        %v228 = vld [vmem:[#allocation5 + $0x28] sm:$0xf]
        %v229 = vld [vmem:[#allocation5 + $0x2c] sm:$0xf]
        %v230 = vld [vmem:[#allocation5 + $0x30] sm:$0xf]
        %v231 = vld [vmem:[#allocation5 + $0x34] sm:$0xf]
        %v232 = vld [vmem:[#allocation5 + $0x38] sm:$0xf]
        %v233 = vld [vmem:[#allocation5 + $0x3c] sm:$0xf]
        %v250 = vunpack.c.l.b16 %v218
        %v251 = vunpack.c.l.b16 %v219
        %v252 = vunpack.c.l.b16 %v220
        %v253 = vunpack.c.l.b16 %v221
        %v254 = vunpack.c.l.b16 %v222
        %v255 = vunpack.c.l.b16 %v223
        %v256 = vunpack.c.l.b16 %v224
        %v257 = vunpack.c.l.b16 %v225
        %v258 = vunpack.c.l.b16 %v226
        %v259 = vunpack.c.l.b16 %v227
        %v260 = vunpack.c.l.b16 %v228
        %v261 = vunpack.c.l.b16 %v229
        %v262 = vunpack.c.l.b16 %v230
        %v263 = vunpack.c.l.b16 %v231
        %v264 = vunpack.c.l.b16 %v232
        %v265 = vunpack.c.l.b16 %v233
        %v266 = vpack.c.b16 %v251, %v250
        %v267 = vpack.c.b16 %v253, %v252
        %v268 = vpack.c.b16 %v255, %v254
        %v269 = vpack.c.b16 %v257, %v256
        %v270 = vpack.c.b16 %v259, %v258
        %v271 = vpack.c.b16 %v261, %v260
        %v272 = vpack.c.b16 %v263, %v262
        %v273 = vpack.c.b16 %v265, %v264
        %282 = vmatprep.subr.bf16.mxu0 0
        %283 = vmatpush1.bf16.msra.mxu0 %v266
        %284 = vmatprep.subr.bf16.mxu0 0
        %285 = vmatpush1.bf16.msra.mxu0 %v267
        %286 = vmatprep.subr.bf16.mxu0 0
        %287 = vmatpush1.bf16.msra.mxu0 %v268
        %288 = vmatprep.subr.bf16.mxu0 0
        %289 = vmatpush1.bf16.msra.mxu0 %v269
        %290 = vmatprep.subr.bf16.mxu0 0
        %291 = vmatpush1.bf16.msra.mxu0 %v270
        %292 = vmatprep.subr.bf16.mxu0 0
        %293 = vmatpush1.bf16.msra.mxu0 %v271
        %294 = vmatprep.subr.bf16.mxu0 0
        %295 = vmatpush1.bf16.msra.mxu0 %v272
        %296 = vmatprep.subr.bf16.mxu0 0
        %297 = vmatpush1.bf16.msra.mxu0 %v273
        %298 = vmatprep.subr.bf16.mxu0 0
        %299 = vmatpush1.bf16.msra.mxu0 0
        %300 = vmatprep.subr.bf16.mxu0 0
        %301 = vmatpush1.bf16.msra.mxu0 0
        %302 = vmatprep.subr.bf16.mxu0 0
        %303 = vmatpush1.bf16.msra.mxu0 0
        %304 = vmatprep.subr.bf16.mxu0 0
        %305 = vmatpush1.bf16.msra.mxu0 0
        %306 = vmatprep.subr.bf16.mxu0 0
        %307 = vmatpush1.bf16.msra.mxu0 0
        %308 = vmatprep.subr.bf16.mxu0 0
        %309 = vmatpush1.bf16.msra.mxu0 0
        %310 = vmatprep.subr.bf16.mxu0 0
        %311 = vmatpush1.bf16.msra.mxu0 0
        %312 = vmatprep.subr.bf16.mxu0 0
        %313 = vmatpush1.bf16.msra.mxu0 0
        %314 = vmatprep.mubr.bf16.mxu0 0
        %315 = vmatmul.mubr.bf16.gmra.mrb[0].mxu0 %v217
        %v316 = vpop.f32.mrb[0].mxu0
        %v317 = vadd.f32 0.0, %v316
        %v318 = vpop.f32.mrb[0].mxu0
        %v319 = vpop.f32.mrb[0].mxu0
        %v320 = vpop.f32.mrb[0].mxu0
        %321 = vdwg.mxu0
        %v322 = vrot.slane %v317, 4
        %v323 = vadd.f32 %v317, %v322
        %v324 = vrot.slane %v323, 2
        %v325 = vadd.f32 %v323, %v324
        %v326 = vrot.slane %v325, 1
        %v327 = vadd.f32 %v325, %v326
        %v328 = vmul.f32 %v327, 0.125
        %v329 = vmul.f32 %v317, %v317
        %v330 = vrot.slane %v329, 4
        %v331 = vadd.f32 %v329, %v330
        %v332 = vrot.slane %v331, 2
        %v333 = vadd.f32 %v331, %v332
        %v334 = vrot.slane %v333, 1
        %v335 = vadd.f32 %v333, %v334
        %v336 = vmul.f32 %v335, 0.125
        %v337 = vmul.f32 %v328, %v328
        %v338 = vsub.f32 %v336, %v337
        %v339 = vmax.f32 %v338, 0.0
        %v340 = vadd.f32 %v339, 1e-05
        %v341 = vrsqrt.pop %v340
        %v342 = vsub.f32 %v317, %v328
        %v343 = vld [vmem:[#allocation7] sm:$0xff]
        %v344 = vmul.f32 %v343, %v341
        %v345 = vmul.f32 %v342, %v344
        %s346 = scalar_lea.vmem [#allocation7], 8
        %v347 = vld [vmem:[%s346] sm:$0xff]
        %v348 = vadd.f32 %v345, %v347
        %v349 = vmax.f32 %v348, 0.0
        %v350 = vadd.f32 %v216, %v349
        %v351 = vpack.c.bf16 %v350, %v350
        %s352 = scalar_lea.vmem [#allocation5], 64
        %v353 = vld [vmem:[%s352] sm:$0xf]
        %v354 = vld [vmem:[%s352 + $0x4] sm:$0xf]
        %v355 = vld [vmem:[%s352 + $0x8] sm:$0xf]
        %v356 = vld [vmem:[%s352 + $0xc] sm:$0xf]
        %v357 = vld [vmem:[%s352 + $0x10] sm:$0xf]
        %v358 = vld [vmem:[%s352 + $0x14] sm:$0xf]
        %v359 = vld [vmem:[%s352 + $0x18] sm:$0xf]
        %v360 = vld [vmem:[%s352 + $0x1c] sm:$0xf]
        %v361 = vld [vmem:[%s352 + $0x20] sm:$0xf]
        %v362 = vld [vmem:[%s352 + $0x24] sm:$0xf]
        %v363 = vld [vmem:[%s352 + $0x28] sm:$0xf]
        %v364 = vld [vmem:[%s352 + $0x2c] sm:$0xf]
        %v365 = vld [vmem:[%s352 + $0x30] sm:$0xf]
        %v366 = vld [vmem:[%s352 + $0x34] sm:$0xf]
        %v367 = vld [vmem:[%s352 + $0x38] sm:$0xf]
        %v368 = vld [vmem:[%s352 + $0x3c] sm:$0xf]
        %v385 = vunpack.c.l.b16 %v353
        %v386 = vunpack.c.l.b16 %v354
        %v387 = vunpack.c.l.b16 %v355
        %v388 = vunpack.c.l.b16 %v356
        %v389 = vunpack.c.l.b16 %v357
        %v390 = vunpack.c.l.b16 %v358
        %v391 = vunpack.c.l.b16 %v359
        %v392 = vunpack.c.l.b16 %v360
        %v393 = vunpack.c.l.b16 %v361
        %v394 = vunpack.c.l.b16 %v362
        %v395 = vunpack.c.l.b16 %v363
        %v396 = vunpack.c.l.b16 %v364
        %v397 = vunpack.c.l.b16 %v365
        %v398 = vunpack.c.l.b16 %v366
        %v399 = vunpack.c.l.b16 %v367
        %v400 = vunpack.c.l.b16 %v368
        %v401 = vpack.c.b16 %v386, %v385
        %v402 = vpack.c.b16 %v388, %v387
        %v403 = vpack.c.b16 %v390, %v389
        %v404 = vpack.c.b16 %v392, %v391
        %v405 = vpack.c.b16 %v394, %v393
        %v406 = vpack.c.b16 %v396, %v395
        %v407 = vpack.c.b16 %v398, %v397
        %v408 = vpack.c.b16 %v400, %v399
        %417 = vmatprep.subr.bf16.mxu0 0
        %418 = vmatpush1.bf16.msra.mxu0 %v401
        %419 = vmatprep.subr.bf16.mxu0 0
        %420 = vmatpush1.bf16.msra.mxu0 %v402
        %421 = vmatprep.subr.bf16.mxu0 0
        %422 = vmatpush1.bf16.msra.mxu0 %v403
        %423 = vmatprep.subr.bf16.mxu0 0
        %424 = vmatpush1.bf16.msra.mxu0 %v404
        %425 = vmatprep.subr.bf16.mxu0 0
        %426 = vmatpush1.bf16.msra.mxu0 %v405
        %427 = vmatprep.subr.bf16.mxu0 0
        %428 = vmatpush1.bf16.msra.mxu0 %v406
        %429 = vmatprep.subr.bf16.mxu0 0
        %430 = vmatpush1.bf16.msra.mxu0 %v407
        %431 = vmatprep.subr.bf16.mxu0 0
        %432 = vmatpush1.bf16.msra.mxu0 %v408
        %433 = vmatprep.subr.bf16.mxu0 0
        %434 = vmatpush1.bf16.msra.mxu0 0
        %435 = vmatprep.subr.bf16.mxu0 0
        %436 = vmatpush1.bf16.msra.mxu0 0
        %437 = vmatprep.subr.bf16.mxu0 0
        %438 = vmatpush1.bf16.msra.mxu0 0
        %439 = vmatprep.subr.bf16.mxu0 0
        %440 = vmatpush1.bf16.msra.mxu0 0
        %441 = vmatprep.subr.bf16.mxu0 0
        %442 = vmatpush1.bf16.msra.mxu0 0
        %443 = vmatprep.subr.bf16.mxu0 0
        %444 = vmatpush1.bf16.msra.mxu0 0
        %445 = vmatprep.subr.bf16.mxu0 0
        %446 = vmatpush1.bf16.msra.mxu0 0
        %447 = vmatprep.subr.bf16.mxu0 0
        %448 = vmatpush1.bf16.msra.mxu0 0
        %449 = vmatprep.mubr.bf16.mxu0 0
        %450 = vmatmul.mubr.bf16.gmra.mrb[0].mxu0 %v351
        %v451 = vpop.f32.mrb[0].mxu0
        %v452 = vadd.f32 0.0, %v451
        %v453 = vpop.f32.mrb[0].mxu0
        %v454 = vpop.f32.mrb[0].mxu0
        %v455 = vpop.f32.mrb[0].mxu0
        %456 = vdwg.mxu0
        %v457 = vrot.slane %v452, 4
        %v458 = vadd.f32 %v452, %v457
        %v459 = vrot.slane %v458, 2
        %v460 = vadd.f32 %v458, %v459
        %v461 = vrot.slane %v460, 1
        %v462 = vadd.f32 %v460, %v461
        %v463 = vmul.f32 %v462, 0.125
        %v464 = vmul.f32 %v452, %v452
        %v465 = vrot.slane %v464, 4
        %v466 = vadd.f32 %v464, %v465
        %v467 = vrot.slane %v466, 2
        %v468 = vadd.f32 %v466, %v467
        %v469 = vrot.slane %v468, 1
        %v470 = vadd.f32 %v468, %v469
        %v471 = vmul.f32 %v470, 0.125
        %v472 = vmul.f32 %v463, %v463
        %v473 = vsub.f32 %v471, %v472
        %v474 = vmax.f32 %v473, 0.0
        %v475 = vadd.f32 %v474, 1e-05
        %v476 = vrsqrt.pop %v475
        %v477 = vsub.f32 %v452, %v463
        %s478 = scalar_lea.vmem [#allocation7], 16
        %v479 = vld [vmem:[%s478] sm:$0xff]
        %v480 = vmul.f32 %v479, %v476
        %v481 = vmul.f32 %v477, %v480
        %s482 = scalar_lea.vmem [#allocation7], 24
        %v483 = vld [vmem:[%s482] sm:$0xff]
        %v484 = vadd.f32 %v481, %v483
        %v485 = vmax.f32 %v484, 0.0
        %v486 = vadd.f32 %v350, %v485
        %v487 = vpack.c.bf16 %v486, %v486
        %s488 = scalar_lea.vmem [#allocation5], 128
        %v489 = vld [vmem:[%s488] sm:$0xf]
        %v490 = vld [vmem:[%s488 + $0x4] sm:$0xf]
        %v491 = vld [vmem:[%s488 + $0x8] sm:$0xf]
        %v492 = vld [vmem:[%s488 + $0xc] sm:$0xf]
        %v493 = vld [vmem:[%s488 + $0x10] sm:$0xf]
        %v494 = vld [vmem:[%s488 + $0x14] sm:$0xf]
        %v495 = vld [vmem:[%s488 + $0x18] sm:$0xf]
        %v496 = vld [vmem:[%s488 + $0x1c] sm:$0xf]
        %v497 = vld [vmem:[%s488 + $0x20] sm:$0xf]
        %v498 = vld [vmem:[%s488 + $0x24] sm:$0xf]
        %v499 = vld [vmem:[%s488 + $0x28] sm:$0xf]
        %v500 = vld [vmem:[%s488 + $0x2c] sm:$0xf]
        %v501 = vld [vmem:[%s488 + $0x30] sm:$0xf]
        %v502 = vld [vmem:[%s488 + $0x34] sm:$0xf]
        %v503 = vld [vmem:[%s488 + $0x38] sm:$0xf]
        %v504 = vld [vmem:[%s488 + $0x3c] sm:$0xf]
        %v521 = vunpack.c.l.b16 %v489
        %v522 = vunpack.c.l.b16 %v490
        %v523 = vunpack.c.l.b16 %v491
        %v524 = vunpack.c.l.b16 %v492
        %v525 = vunpack.c.l.b16 %v493
        %v526 = vunpack.c.l.b16 %v494
        %v527 = vunpack.c.l.b16 %v495
        %v528 = vunpack.c.l.b16 %v496
        %v529 = vunpack.c.l.b16 %v497
        %v530 = vunpack.c.l.b16 %v498
        %v531 = vunpack.c.l.b16 %v499
        %v532 = vunpack.c.l.b16 %v500
        %v533 = vunpack.c.l.b16 %v501
        %v534 = vunpack.c.l.b16 %v502
        %v535 = vunpack.c.l.b16 %v503
        %v536 = vunpack.c.l.b16 %v504
        %v537 = vpack.c.b16 %v522, %v521
        %v538 = vpack.c.b16 %v524, %v523
        %v539 = vpack.c.b16 %v526, %v525
        %v540 = vpack.c.b16 %v528, %v527
        %v541 = vpack.c.b16 %v530, %v529
        %v542 = vpack.c.b16 %v532, %v531
        %v543 = vpack.c.b16 %v534, %v533
        %v544 = vpack.c.b16 %v536, %v535
        %553 = vmatprep.subr.bf16.mxu0 0
        %554 = vmatpush1.bf16.msra.mxu0 %v537
        %555 = vmatprep.subr.bf16.mxu0 0
        %556 = vmatpush1.bf16.msra.mxu0 %v538
        %557 = vmatprep.subr.bf16.mxu0 0
        %558 = vmatpush1.bf16.msra.mxu0 %v539
        %559 = vmatprep.subr.bf16.mxu0 0
        %560 = vmatpush1.bf16.msra.mxu0 %v540
        %561 = vmatprep.subr.bf16.mxu0 0
        %562 = vmatpush1.bf16.msra.mxu0 %v541
        %563 = vmatprep.subr.bf16.mxu0 0
        %564 = vmatpush1.bf16.msra.mxu0 %v542
        %565 = vmatprep.subr.bf16.mxu0 0
        %566 = vmatpush1.bf16.msra.mxu0 %v543
        %567 = vmatprep.subr.bf16.mxu0 0
        %568 = vmatpush1.bf16.msra.mxu0 %v544
        %569 = vmatprep.subr.bf16.mxu0 0
        %570 = vmatpush1.bf16.msra.mxu0 0
        %571 = vmatprep.subr.bf16.mxu0 0
        %572 = vmatpush1.bf16.msra.mxu0 0
        %573 = vmatprep.subr.bf16.mxu0 0
        %574 = vmatpush1.bf16.msra.mxu0 0
        %575 = vmatprep.subr.bf16.mxu0 0
        %576 = vmatpush1.bf16.msra.mxu0 0
        %577 = vmatprep.subr.bf16.mxu0 0
        %578 = vmatpush1.bf16.msra.mxu0 0
        %579 = vmatprep.subr.bf16.mxu0 0
        %580 = vmatpush1.bf16.msra.mxu0 0
        %581 = vmatprep.subr.bf16.mxu0 0
        %582 = vmatpush1.bf16.msra.mxu0 0
        %583 = vmatprep.subr.bf16.mxu0 0
        %584 = vmatpush1.bf16.msra.mxu0 0
        %585 = vmatprep.mubr.bf16.mxu0 0
        %586 = vmatmul.mubr.bf16.gmra.mrb[0].mxu0 %v487
        %v587 = vpop.f32.mrb[0].mxu0
        %v588 = vadd.f32 0.0, %v587
        %v589 = vpop.f32.mrb[0].mxu0
        %v590 = vpop.f32.mrb[0].mxu0
        %v591 = vpop.f32.mrb[0].mxu0
        %592 = vdwg.mxu0
        %v593 = vrot.slane %v588, 4
        %v594 = vadd.f32 %v588, %v593
        %v595 = vrot.slane %v594, 2
        %v596 = vadd.f32 %v594, %v595
        %v597 = vrot.slane %v596, 1
        %v598 = vadd.f32 %v596, %v597
        %v599 = vmul.f32 %v598, 0.125
        %v600 = vmul.f32 %v588, %v588
        %v601 = vrot.slane %v600, 4
        %v602 = vadd.f32 %v600, %v601
        %v603 = vrot.slane %v602, 2
        %v604 = vadd.f32 %v602, %v603
        %v605 = vrot.slane %v604, 1
        %v606 = vadd.f32 %v604, %v605
        %v607 = vmul.f32 %v606, 0.125
        %v608 = vmul.f32 %v599, %v599
        %v609 = vsub.f32 %v607, %v608
        %v610 = vmax.f32 %v609, 0.0
        %v611 = vadd.f32 %v610, 1e-05
        %v612 = vrsqrt.pop %v611
        %v613 = vsub.f32 %v588, %v599
        %s614 = scalar_lea.vmem [#allocation7], 32
        %v615 = vld [vmem:[%s614] sm:$0xff]
        %v616 = vmul.f32 %v615, %v612
        %v617 = vmul.f32 %v613, %v616
        %s618 = scalar_lea.vmem [#allocation7], 40
        %v619 = vld [vmem:[%s618] sm:$0xff]
        %v620 = vadd.f32 %v617, %v619
        %v621 = vmax.f32 %v620, 0.0
        %622 = vst [vmem:[%s214] sm:$0xff] %v621
        %s623 = sand.u32 %s97, 1
        %s624 = scalar_lea.sflag [#allocation4], %s623
        %s625 = sand.u32 %s97, 1
        %s626 = smul.addr %s625, 8
        %s627 = scalar_lea.vmem [#allocation8], %s626
        // Predicated region
        $region45: #{generator_forward.1} parent=31 // pred_check
          %p628 = pneg %p107
        $region46: #{generator_forward.1} parent=31 // pred_check_branch
          %630 = sbr.rel (%p628) target = $region48
        $region47: #{generator_forward.1} parent=31 // pred_region
          %s632 = ssub.s32 128, 128
          %633 = vsyncadd %s624, %s632
          %s634 = smul.addr %s21, 128
          %s635 = scalar_lea.hbm %s3, %s634
          %s637 = sshll.u32 %s627, 4
          %s638 = int_to_ptr.vmem [resolvable:$true] %s637
          %640 = dma.vmem_to_hbm [thread:$0]  %s638, 128, %s635, %s624
        $region48: #{generator_forward.1} parent=31 // pred_fallthru
          _
      $region32: #{generator_forward.1} parent=5 // pred_fallthru
        _
      %p641 = scmp.le.s32.totalorder 2, %s16
      // Predicated region
      $region49: #{generator_forward.1} parent=5 // pred_check
        %p642 = pneg %p641
      $region50: #{generator_forward.1} parent=5 // pred_check_branch
        %644 = sbr.rel (%p642) target = $region52
      $region51: #{generator_forward.1} parent=5 // pred_region
        %s645 = ssub.s32 %s16, 2
        // Predicated region
        $region53: #{generator_forward.1} parent=51 // pred_check
          %p646 = pneg %p113
        $region54: #{generator_forward.1} parent=51 // pred_check_branch
          %648 = sbr.rel (%p646) target = $region56
        $region55: #{generator_forward.1} parent=51 // pred_region
          %s649 = sand.u32 %s98, 1
          %s650 = scalar_lea.sflag [#allocation4], %s649
          %s651 = sand.u32 %s98, 1
          %s652 = smul.addr %s651, 8
          %s653 = scalar_lea.vmem [#allocation8], %s652
          %654 = dma.done %s650, 128
        $region56: #{generator_forward.1} parent=51 // pred_fallthru
          _
      $region52: #{generator_forward.1} parent=5 // pred_fallthru
        _
    $region6: #{generator_forward.1} parent=1 // loop_footer
      %s20 = sadd.s32 1, %s16
    $region7: #{generator_forward.1} parent=1 // loop_footer_branch
      %15 = sbr.rel target = $region3
    $region8: #{generator_forward.1} parent=1 // loop_exit
      _
    %655 = vsyncpa [#allocation3], 1
    %s656 = scalar_lea.sflag [#allocation3], 1
    %657 = vsyncpa %s656, 1
    %658 = vsyncpa [#allocation6], 1
    %659 = vsyncpa [#allocation4], 1
    %s660 = scalar_lea.sflag [#allocation4], 1
    %661 = vsyncpa %s660, 1

</llo_original>
